<compile_context>
chip_gen: v6e
topology: v6e:2x2x1
jax: 0.10.0
libtpu: 0.0.40
codegen_flags: <defaults>
</compile_context>

<pallas_src>
import functools

import jax
import jax.numpy as jnp
from jax.experimental import pallas as pl
from jax.experimental.pallas import tpu as pltpu

EPS = 1e-6


def vn_leaky_relu_kernel(w_ref, g_ref, x_ref, o_ref, *, negative_slope):
    # w_ref: (3C, 3C) = W (kron) I3       g_ref: (3C, 3C) = I_C (kron) ones(3,3)
    # x_ref/o_ref: (1, 3C, TN), rows r = c*3 + v (native [B,C,3,N] memory order).
    x = x_ref[0]                                                     # (3C, TN)

    # Direction field: one wide MXU matmul in the interleaved row space.
    # Operands fed in their native dtype; accumulation in f32 (fast MXU path).
    d = jnp.dot(w_ref[...], x, preferred_element_type=jnp.float32)   # (3C, TN) f32

    xf = x.astype(jnp.float32)
    g = g_ref[...]
    # Per-channel reductions over the 3-vector axis, broadcast back to every row
    # of the channel, done on the otherwise-idle MXU (keeps the VPU free).
    dot_b = jnp.dot(g, xf * d, preferred_element_type=jnp.float32)   # dotprod per channel
    nrm_b = jnp.dot(g, d * d, preferred_element_type=jnp.float32)    # ||d||^2 per channel

    # EUP reciprocal.  approx=True would save a few VALU refinement ops but costs
    # ~1e-3 relative error; keep the exact one so the 1e-5 correctness check holds.
    inv = pl.reciprocal(nrm_b + EPS, approx=False)

    # Fused blend:  ns*x + (1-ns)*(mask*x + (1-mask)*(x - coef*d)) == x - s*d
    # with s = (1-ns)*coef where dotprod < 0, else 0.
    s = jnp.where(dot_b < 0.0, (1.0 - negative_slope) * (dot_b * inv), 0.0)
    o_ref[0] = (xf - s * d).astype(o_ref.dtype)


def _choose_tn(n, c3, itemsize):
    """Largest lane tile (multiple of 128) dividing N, capped for VMEM safety."""
    if n % 128 != 0:
        return n                        # single block along N (block dim == full dim)
    cap_bytes = 4 * 1024 * 1024         # per-block cap: double-buffered in+out stays
                                        # well under the 32 MiB scoped default (v7x-safe)
    cap = max(128, min(2048, (cap_bytes // (c3 * itemsize)) // 128 * 128))
    tn = min(n, cap)
    while n % tn:
        tn -= 128
    return tn


def vn_leaky_relu(x, w, negative_slope=0.2, tn=None):
    """x: [B, C, 3, N] (PyTorch layout), w: [C, C] Linear weight (no bias)."""
    B, C, V, N = x.shape
    assert V == 3
    C_out, C_in = w.shape
    # TODO(synk): share_nonlinearity=True (Linear(C->1) shared direction) not implemented.
    assert C_out == C and C_in == C, "kernel implements the C->C (non-shared) map"

    C3 = 3 * C
    x2 = x.reshape(B, C3, N)            # free reshape (row-major merge), no HBM transpose
    # Lift W to the interleaved (c, v) row space and build the v-reduction matrix.
    w_exp = jnp.kron(w.astype(x.dtype), jnp.eye(3, dtype=x.dtype))            # (3C, 3C)
    g = jnp.kron(jnp.eye(C, dtype=jnp.float32), jnp.ones((3, 3), jnp.float32))

    if tn is None:
        tn = _choose_tn(N, C3, jnp.dtype(x.dtype).itemsize)
    assert N % tn == 0, f"tn={tn} must divide N={N}"

    kernel = functools.partial(vn_leaky_relu_kernel,
                               negative_slope=float(negative_slope))

    out = pl.pallas_call(
        kernel,
        out_shape=jax.ShapeDtypeStruct((B, C3, N), x.dtype),
        grid_spec=pltpu.PrefetchScalarGridSpec(
            num_scalar_prefetch=0,
            grid=(B, N // tn),
            in_specs=[
                pl.BlockSpec((C3, C3), lambda b, n: (0, 0)),        # W (kron) I3, resident
                pl.BlockSpec((C3, C3), lambda b, n: (0, 0)),        # I_C (kron) 1, resident
                pl.BlockSpec((1, C3, tn), lambda b, n: (b, 0, n)),  # lane-dense x tile
            ],
            out_specs=pl.BlockSpec((1, C3, tn), lambda b, n: (b, 0, n)),
        ),
        compiler_params=pltpu.CompilerParams(
            dimension_semantics=("parallel", "parallel")),
    )(w_exp, g, x2)

    return out.reshape(B, C, 3, N)      # free reshape back to PyTorch layout


def vn_leaky_relu_ref(x, w, negative_slope=0.2):
    """Pure-JAX reference mirroring the PyTorch forward."""
    d = jnp.einsum('oc,bcvn->bovn', w, x)
    dotprod = jnp.sum(x * d, axis=2, keepdims=True)
    mask = (dotprod >= 0).astype(x.dtype)
    d_norm_sq = jnp.sum(d * d, axis=2, keepdims=True)
    return negative_slope * x + (1 - negative_slope) * (
        mask * x + (1 - mask) * (x - dotprod / (d_norm_sq + EPS) * d))


if __name__ == "__main__":
    B, C, N = 2, 8, 512
    negative_slope = 0.2

    key = jax.random.PRNGKey(0)
    kx, kw = jax.random.split(key)
    x = jax.random.normal(kx, (B, C, 3, N), dtype=jnp.float32)
    # nn.Linear(C, C, bias=False) -> weight [C, C], kaiming-uniform-style init.
    bound = 1.0 / jnp.sqrt(jnp.float32(C))
    w = jax.random.uniform(kw, (C, C), minval=-bound, maxval=bound, dtype=jnp.float32)

    ref = jax.block_until_ready(vn_leaky_relu_ref(x, w, negative_slope))

    # Explicitly tiled path (grid=(B, N//128)) and auto-tile path.
    out_tiled = jax.block_until_ready(vn_leaky_relu(x, w, negative_slope, tn=128))
    out_auto = jax.block_until_ready(vn_leaky_relu(x, w, negative_slope))

    for out in (out_tiled, out_auto):
        assert out.shape == x.shape and out.dtype == x.dtype
        err = float(jnp.max(jnp.abs(out - ref)))
        assert jnp.allclose(out, ref, rtol=1e-5, atol=1e-5), err
    print("KERNEL_OK")
</pallas_src>

<mosaic_0001>
module attributes {stable_mosaic.version = 11 : i64} {
  func.func @vn_leaky_relu_kernel(%arg0: i32, %arg1: i32, %arg2: memref<24x24xf32, #tpu.memory_space<vmem>>, %arg3: memref<24x24xf32, #tpu.memory_space<vmem>>, %arg4: memref<1x24x128xf32, #tpu.memory_space<vmem>>, %arg5: memref<1x24x128xf32, #tpu.memory_space<vmem>>) attributes {dimension_semantics = [#tpu.dimension_semantics<parallel>, #tpu.dimension_semantics<parallel>], iteration_bounds = array<i64: 2, 4>, scalar_prefetch = 0 : i64, scratch_operands = 0 : i64, tpu.core_type = #tpu.core_type<tc>, window_params = [{pipeline_mode = #tpu.pipeline_mode<synchronous>, transform_indices = @transform_0, window_bounds = array<i64: 24, 24>}, {pipeline_mode = #tpu.pipeline_mode<synchronous>, transform_indices = @transform_1, window_bounds = array<i64: 24, 24>}, {transform_indices = @transform_2, window_bounds = array<i64: 1, 24, 128>}, {transform_indices = @transform_3, window_bounds = array<i64: 1, 24, 128>}]} {
    %c0 = arith.constant 0 : index
    %c0_0 = arith.constant 0 : index
    %c0_1 = arith.constant 0 : index
    %0 = vector.load %arg4[%c0, %c0_0, %c0_1] : memref<1x24x128xf32, #tpu.memory_space<vmem>>, vector<1x24x128xf32>
    %1 = vector.shape_cast %0 : vector<1x24x128xf32> to vector<24x128xf32>
    %c0_2 = arith.constant 0 : index
    %c0_3 = arith.constant 0 : index
    %2 = vector.load %arg2[%c0_2, %c0_3] : memref<24x24xf32, #tpu.memory_space<vmem>>, vector<24x24xf32>
    %cst = arith.constant dense<0.000000e+00> : vector<24x128xf32>
    %3 = tpu.matmul %2, %1, %cst {dimension_numbers = #tpu.dot_dimension_numbers<[1], [0], [0], [1], [0, 0, 1, 1], [], []>} : vector<24x24xf32>, vector<24x128xf32>, vector<24x128xf32> -> vector<24x128xf32>
    %c0_4 = arith.constant 0 : index
    %c0_5 = arith.constant 0 : index
    %4 = vector.load %arg3[%c0_4, %c0_5] : memref<24x24xf32, #tpu.memory_space<vmem>>, vector<24x24xf32>
    %5 = arith.mulf %1, %3 : vector<24x128xf32>
    %cst_6 = arith.constant dense<0.000000e+00> : vector<24x128xf32>
    %6 = tpu.matmul %4, %5, %cst_6 {dimension_numbers = #tpu.dot_dimension_numbers<[1], [0], [0], [1], [0, 0, 1, 1], [], []>} : vector<24x24xf32>, vector<24x128xf32>, vector<24x128xf32> -> vector<24x128xf32>
    %7 = arith.mulf %3, %3 : vector<24x128xf32>
    %cst_7 = arith.constant dense<0.000000e+00> : vector<24x128xf32>
    %8 = tpu.matmul %4, %7, %cst_7 {dimension_numbers = #tpu.dot_dimension_numbers<[1], [0], [0], [1], [0, 0, 1, 1], [], []>} : vector<24x24xf32>, vector<24x128xf32>, vector<24x128xf32> -> vector<24x128xf32>
    %cst_8 = arith.constant 9.99999997E-7 : f32
    %9 = vector.broadcast %cst_8 : f32 to vector<24x128xf32>
    %10 = arith.addf %8, %9 : vector<24x128xf32>
    %11 = tpu.reciprocal %10 : vector<24x128xf32> -> vector<24x128xf32>
    %cst_9 = arith.constant 0.000000e+00 : f32
    %12 = vector.broadcast %cst_9 : f32 to vector<24x128xf32>
    %13 = arith.cmpf olt, %6, %12 : vector<24x128xf32>
    %14 = arith.mulf %6, %11 : vector<24x128xf32>
    %cst_10 = arith.constant 8.000000e-01 : f32
    %15 = vector.broadcast %cst_10 : f32 to vector<24x128xf32>
    %16 = arith.mulf %15, %14 : vector<24x128xf32>
    %cst_11 = arith.constant 0.000000e+00 : f32
    %17 = vector.broadcast %cst_11 : f32 to vector<24x128xf32>
    %18 = arith.select %13, %16, %17 : vector<24x128xi1>, vector<24x128xf32>
    %19 = arith.mulf %18, %3 : vector<24x128xf32>
    %20 = arith.subf %1, %19 : vector<24x128xf32>
    %c0_12 = arith.constant 0 : index
    %c0_13 = arith.constant 0 : index
    %c0_14 = arith.constant 0 : index
    %21 = vector.load %arg5[%c0_12, %c0_13, %c0_14] : memref<1x24x128xf32, #tpu.memory_space<vmem>>, vector<1x24x128xf32>
    %22 = vector.shape_cast %21 : vector<1x24x128xf32> to vector<24x128xf32>
    %23 = vector.shape_cast %20 : vector<24x128xf32> to vector<1x24x128xf32>
    tpu.vector_store %arg5[%c0_12, %c0_13, %c0_14], %23 {strides = array<i32>} : memref<1x24x128xf32, #tpu.memory_space<vmem>>, vector<1x24x128xf32>,
    return
  }
  func.func @transform_0(%arg0: i32, %arg1: i32) -> (i32, i32) {
    %c0_i32 = arith.constant 0 : i32
    %c0_i32_0 = arith.constant 0 : i32
    %c0_i32_1 = arith.constant 0 : i32
    return %c0_i32, %c0_i32_0 : i32, i32
  }
  func.func @transform_1(%arg0: i32, %arg1: i32) -> (i32, i32) {
    %c0_i32 = arith.constant 0 : i32
    %c0_i32_0 = arith.constant 0 : i32
    %c0_i32_1 = arith.constant 0 : i32
    return %c0_i32, %c0_i32_0 : i32, i32
  }
  func.func @transform_2(%arg0: i32, %arg1: i32) -> (i32, i32, i32) {
    %c0_i32 = arith.constant 0 : i32
    %c0_i32_0 = arith.constant 0 : i32
    return %arg0, %c0_i32, %arg1 : i32, i32, i32
  }
  func.func @transform_3(%arg0: i32, %arg1: i32) -> (i32, i32, i32) {
    %c0_i32 = arith.constant 0 : i32
    %c0_i32_0 = arith.constant 0 : i32
    return %arg0, %c0_i32, %arg1 : i32, i32, i32
  }
}

</mosaic_0001>

<llo_original>
// kernel: tpu_custom_call.1
$region0: #{tpu_custom_call.1}
  #allocation0 [shape = 'u32[]', space=smem, size = 0x4, offset = 0x4, fixed_abs, tag = 'smem constant byte address 0x4 - core index']
  #allocation1 [shape = 'u32[144,128]{1,0:T(1,128)}', space=vmem, size = 0x12000, scoped, tag = 'internal scratch']
  %s0 = inlined_call_operand.hbm [shape: f32[24,24], index: 0, kind: input, shape index: {}]
  %s1 = inlined_call_operand.hbm [shape: f32[24,24], index: 1, kind: input, shape index: {}]
  %s2 = inlined_call_operand.hbm [shape: f32[2,24,512], index: 2, kind: input, shape index: {}]
  %s3 = inlined_call_operand.hbm [shape: f32[2,24,512], index: 3, kind: output, shape index: {}]
  %s4 = sld [smem:[#allocation0]]
  $region57: #{tpu_custom_call.1} parent=0
    _
  %s6 = ssub.s32 1, %s4
  %s7 = scalar_select 0, %s6, %s4
  $region1: #{tpu_custom_call.1} parent=0
    #allocation2 [shape = 'u8[12288]{0}', space=vmem, size = 0x3000, scoped, tag = 'input window, operand 0, single buffered']
    #allocation3 [shape = 's32[2]{0}', space=sflag, size = 0x8, scoped, tag = 'scoped memory for tpu_custom_call.1']
    #allocation4 [shape = 's32[2]{0}', space=sflag, size = 0x8, scoped, tag = 'scoped memory for tpu_custom_call.1']
    #allocation5 [shape = 'u8[12288]{0}', space=vmem, size = 0x3000, scoped, tag = 'input window, operand 1, single buffered']
    #allocation6 [shape = 's32[1]{0}', space=sflag, size = 0x4, scoped, tag = 'scoped memory for tpu_custom_call.1']
    #allocation7 [shape = 'u8[24576]{0}', space=vmem, size = 0x6000, scoped, tag = 'input window, operand 2']
    #allocation8 [shape = 'u8[24576]{0}', space=vmem, size = 0x6000, scoped, tag = 'output window, operand 0']
    %8 = vsyncpa [#allocation3], 0
    %9 = vsyncpa [#allocation6], 0
    %10 = vsyncpa [#allocation4], 0
    %s11 = scalar_lea.sflag [#allocation4], 1
    %12 = vsyncpa %s11, 0
    loop: start=0, step=1, limit=10
    $region2: #{tpu_custom_call.1} parent=1 // loop_pre_header
      _
    $region3: #{tpu_custom_call.1} parent=1 // loop_header
      %s14 = sphi 0, %s18
      %p15 = scmp.ge.s32.totalorder %s14, 10
      %s21 = sphi 0, %s33
      %s22 = sphi 0, %s29
      %s23 = sphi 0, %s21
      %s24 = sphi 0, %s22
      %s25 = sphi 0, %s23
      %s26 = sphi 0, %s24
      %s34 = sphi 0, %s34
      %s36 = sphi 0, %s34
      %s37 = sphi 0, %s36
      %s51 = sphi 0, %s37
      %s55 = sphi 0, %s55
      %s57 = sphi 0, %s55
      %s58 = sphi 0, %s57
      %s72 = sphi 0, %s58
      %s80 = sphi 0, %s82
      %s83 = sphi 0, %s80
      %s84 = sphi 0, %s83
      %s100 = sphi 0, %s84
      %s108 = sphi 0, %s110
      %s111 = sphi 0, %s108
      %s112 = sphi 0, %s111
      %s128 = sphi 0, %s112
    $region4: #{tpu_custom_call.1} parent=1 // loop_header_branch
      %17 = sbr.rel (%p15) target = $region8
    $region5: #{tpu_custom_call.1} parent=1 // loop_body
      %s19 = ssub.s32 %s14, 1
      %s20 = ssub.s32 %s14, 2
      %s27 = sadd.s32 1, %s22
      %p28 = scmp.ge.s32.totalorder %s27, 4
      %s29 = scalar_select %p28, 0, %s27
      %s30 = sadd.s32 1, %s21
      %s31 = scalar_select %p28, %s30, %s21
      %p32 = scmp.ge.s32.totalorder %s31, 2
      %s33 = scalar_select %p32, 0, %s31
      %s35 = sadd.s32 %s34, 1
      %p38 = scmp.eq.s32.totalorder %s14, 7
      %p39 = scmp.ne.s32.totalorder %s34, %s36
      %p40 = scmp.eq.s32.totalorder %s14, 0
      %p41 = por %p39, %p40
      %p42 = scmp.ne.s32.totalorder %s34, %s36
      %p43 = scmp.eq.s32.totalorder %s19, 7
      %p44 = por %p42, %p43
      %p45 = scmp.ne.s32.totalorder %s36, %s37
      %p46 = scmp.eq.s32.totalorder %s19, 0
      %p47 = por %p45, %p46
      %p48 = scmp.ne.s32.totalorder %s36, %s37
      %p49 = scmp.eq.s32.totalorder %s20, 7
      %p50 = por %p48, %p49
      %p52 = scmp.ne.s32.totalorder %s37, %s51
      %p53 = scmp.eq.s32.totalorder %s20, 0
      %p54 = por %p52, %p53
      %s56 = sadd.s32 %s55, 1
      %p59 = scmp.eq.s32.totalorder %s14, 7
      %p60 = scmp.ne.s32.totalorder %s55, %s57
      %p61 = scmp.eq.s32.totalorder %s14, 0
      %p62 = por %p60, %p61
      %p63 = scmp.ne.s32.totalorder %s55, %s57
      %p64 = scmp.eq.s32.totalorder %s19, 7
      %p65 = por %p63, %p64
      %p66 = scmp.ne.s32.totalorder %s57, %s58
      %p67 = scmp.eq.s32.totalorder %s19, 0
      %p68 = por %p66, %p67
      %p69 = scmp.ne.s32.totalorder %s57, %s58
      %p70 = scmp.eq.s32.totalorder %s20, 7
      %p71 = por %p69, %p70
      %p73 = scmp.ne.s32.totalorder %s58, %s72
      %p74 = scmp.eq.s32.totalorder %s20, 0
      %p75 = por %p73, %p74
      %s76 = ssub.s32 %s21, %s33
      %s77 = ssub.s32 %s22, %s29
      %s78 = sor.u32 %s76, %s77
      %p79 = scmp.eq.s32.totalorder %s78, 0
      %s81 = sadd.s32 %s80, 1
      %s82 = scalar_select %p79, %s80, %s81
      %p85 = pneg %p79
      %p86 = scmp.eq.s32.totalorder %s14, 7
      %p87 = por %p85, %p86
      %p88 = scmp.ne.s32.totalorder %s80, %s83
      %p89 = scmp.eq.s32.totalorder %s14, 0
      %p90 = por %p88, %p89
      %p91 = scmp.ne.s32.totalorder %s80, %s83
      %p92 = scmp.eq.s32.totalorder %s19, 7
      %p93 = por %p91, %p92
      %p94 = scmp.ne.s32.totalorder %s83, %s84
      %p95 = scmp.eq.s32.totalorder %s19, 0
      %p96 = por %p94, %p95
      %p97 = scmp.ne.s32.totalorder %s83, %s84
      %p98 = scmp.eq.s32.totalorder %s20, 7
      %p99 = por %p97, %p98
      %p101 = scmp.ne.s32.totalorder %s84, %s100
      %p102 = scmp.eq.s32.totalorder %s20, 0
      %p103 = por %p101, %p102
      %s104 = ssub.s32 %s21, %s33
      %s105 = ssub.s32 %s22, %s29
      %s106 = sor.u32 %s104, %s105
      %p107 = scmp.eq.s32.totalorder %s106, 0
      %s109 = sadd.s32 %s108, 1
      %s110 = scalar_select %p107, %s108, %s109
      %p113 = pneg %p107
      %p114 = scmp.eq.s32.totalorder %s14, 7
      %p115 = por %p113, %p114
      %p116 = scmp.ne.s32.totalorder %s108, %s111
      %p117 = scmp.eq.s32.totalorder %s14, 0
      %p118 = por %p116, %p117
      %p119 = scmp.ne.s32.totalorder %s108, %s111
      %p120 = scmp.eq.s32.totalorder %s19, 7
      %p121 = por %p119, %p120
      %p122 = scmp.ne.s32.totalorder %s111, %s112
      %p123 = scmp.eq.s32.totalorder %s19, 0
      %p124 = por %p122, %p123
      %p125 = scmp.ne.s32.totalorder %s111, %s112
      %p126 = scmp.eq.s32.totalorder %s20, 7
      %p127 = por %p125, %p126
      %p129 = scmp.ne.s32.totalorder %s112, %s128
      %p130 = scmp.eq.s32.totalorder %s20, 0
      %p131 = por %p129, %p130
      %p132 = scmp.le.s32.totalorder 1, %s14
      %p133 = scmp.lt.s32.totalorder %s14, 9
      %p134 = pnand %p132, %p133
      %p135 = pneg %p134
      // Predicated region
      $region9: #{tpu_custom_call.1} parent=5 // pred_check
        _
      $region10: #{tpu_custom_call.1} parent=5 // pred_check_branch
        %137 = sbr.rel (%p134) target = $region12
      $region11: #{tpu_custom_call.1} parent=5 // pred_region
        %s138 = ssub.s32 %s14, 1
        // Predicated region
        $region13: #{tpu_custom_call.1} parent=11 // pred_check
          %p139 = pneg %p47
        $region14: #{tpu_custom_call.1} parent=11 // pred_check_branch
          %141 = sbr.rel (%p139) target = $region16
        $region15: #{tpu_custom_call.1} parent=11 // pred_region
          %s143 = ssub.s32 384, 384
          %144 = vsyncadd [#allocation3], %s143
          %s145 = sshll.u32 [#allocation2], 4
          %s146 = int_to_ptr.vmem [resolvable:$true] %s145
          %151 = dma.hbm_to_vmem [thread:$0]  %s0, 384, %s146, [#allocation3], 128, 128, 8
        $region16: #{tpu_custom_call.1} parent=11 // pred_fallthru
          _
        // Predicated region
        $region17: #{tpu_custom_call.1} parent=11 // pred_check
          %p152 = pneg %p68
        $region18: #{tpu_custom_call.1} parent=11 // pred_check_branch
          %154 = sbr.rel (%p152) target = $region20
        $region19: #{tpu_custom_call.1} parent=11 // pred_region
          %s156 = ssub.s32 384, 384
          %157 = vsyncadd [#allocation6], %s156
          %s158 = sshll.u32 [#allocation5], 4
          %s159 = int_to_ptr.vmem [resolvable:$true] %s158
          %164 = dma.hbm_to_vmem [thread:$0]  %s1, 384, %s159, [#allocation6], 128, 128, 8
        $region20: #{tpu_custom_call.1} parent=11 // pred_fallthru
          _
      $region12: #{tpu_custom_call.1} parent=5 // pred_fallthru
        _
      %p165 = scmp.lt.s32.totalorder %s14, 8
      // Predicated region
      $region21: #{tpu_custom_call.1} parent=5 // pred_check
        %p166 = pneg %p165
      $region22: #{tpu_custom_call.1} parent=5 // pred_check_branch
        %168 = sbr.rel (%p166) target = $region24
      $region23: #{tpu_custom_call.1} parent=5 // pred_region
        // Predicated region
        $region25: #{tpu_custom_call.1} parent=23 // pred_check
          %p169 = pneg %p90
        $region26: #{tpu_custom_call.1} parent=23 // pred_check_branch
          %171 = sbr.rel (%p169) target = $region28
        $region27: #{tpu_custom_call.1} parent=23 // pred_region
          %s172 = sand.u32 %s14, 1
          %s173 = scalar_lea.sflag [#allocation3], %s172
          %s174 = sand.u32 %s80, 1
          %s175 = smul.addr %s174, 24
          %s176 = scalar_lea.vmem [#allocation7], %s175
          %s178 = ssub.s32 384, 384
          %179 = vsyncadd %s173, %s178
          %s180 = smul.addr %s21, 12
          %s181 = sadd.s32 %s22, %s180
          %s182 = smul.addr %s181, 128
          %s183 = scalar_lea.hbm %s2, %s182
          %s184 = sshll.u32 %s176, 4
          %s185 = int_to_ptr.vmem [resolvable:$true] %s184
          %190 = dma.hbm_to_vmem [thread:$0]  %s183, 384, %s185, %s173, 512, 128, 8
        $region28: #{tpu_custom_call.1} parent=23 // pred_fallthru
          _
      $region24: #{tpu_custom_call.1} parent=5 // pred_fallthru
        _
      %p191 = scmp.le.s32.totalorder 1, %s14
      %p192 = scmp.lt.s32.totalorder %s14, 9
      %p193 = pnand %p191, %p192
      %p194 = pneg %p193
      // Predicated region
      $region29: #{tpu_custom_call.1} parent=5 // pred_check
        _
      $region30: #{tpu_custom_call.1} parent=5 // pred_check_branch
        %196 = sbr.rel (%p193) target = $region32
      $region31: #{tpu_custom_call.1} parent=5 // pred_region
        %s197 = ssub.s32 %s14, 1
        // Predicated region
        $region33: #{tpu_custom_call.1} parent=31 // pred_check
          %p198 = pneg %p47
        $region34: #{tpu_custom_call.1} parent=31 // pred_check_branch
          %200 = sbr.rel (%p198) target = $region36
        $region35: #{tpu_custom_call.1} parent=31 // pred_region
          %201 = dma.done [#allocation3], 384
        $region36: #{tpu_custom_call.1} parent=31 // pred_fallthru
          _
        // Predicated region
        $region37: #{tpu_custom_call.1} parent=31 // pred_check
          %p202 = pneg %p68
        $region38: #{tpu_custom_call.1} parent=31 // pred_check_branch
          %204 = sbr.rel (%p202) target = $region40
        $region39: #{tpu_custom_call.1} parent=31 // pred_region
          %205 = dma.done [#allocation6], 384
        $region40: #{tpu_custom_call.1} parent=31 // pred_fallthru
          _
        %s206 = sand.u32 %s19, 1
        %s207 = scalar_lea.sflag [#allocation3], %s206
        %s208 = sand.u32 %s83, 1
        %s209 = smul.addr %s208, 24
        %s210 = scalar_lea.vmem [#allocation7], %s209
        // Predicated region
        $region41: #{tpu_custom_call.1} parent=31 // pred_check
          %p211 = pneg %p96
        $region42: #{tpu_custom_call.1} parent=31 // pred_check_branch
          %213 = sbr.rel (%p211) target = $region44
        $region43: #{tpu_custom_call.1} parent=31 // pred_region
          %214 = dma.done %s207, 384
        $region44: #{tpu_custom_call.1} parent=31 // pred_fallthru
          _
        %p215 = pneg %p47
        %p216 = pneg %p44
        %p217 = pneg %p68
        %p218 = pneg %p65
        %s219 = sand.u32 %s19, 1
        %s220 = scalar_lea.sflag [#allocation3], %s219
        %s221 = sand.u32 %s83, 1
        %s222 = smul.addr %s221, 24
        %s223 = scalar_lea.vmem [#allocation7], %s222
        %p224 = pneg %p96
        %p225 = pneg %p93
        %p226 = pneg %p124
        %p227 = pneg %p121
        %s228 = sand.u32 %s111, 1
        %s229 = scalar_lea.sflag [#allocation4], %s228
        %s230 = sand.u32 %s111, 1
        %s231 = smul.addr %s230, 24
        %s232 = scalar_lea.vmem [#allocation8], %s231
        %v233 = vld [vmem:[%s210] sm:$0xff]
        %v234 = vld [vmem:[%s210 + $0x8] sm:$0xff]
        %v235 = vld [vmem:[%s210 + $0x10] sm:$0xff]
        %v236 = vld [vmem:[#allocation2] sm:$0xff]
        %v237 = vld [vmem:[#allocation2 + $0x8] sm:$0xff]
        %v238 = vld [vmem:[#allocation2 + $0x10] sm:$0xff]
        %vm239 = vcmask 195584
        %v241 = vsel %vm239, %v236, 0
        %v244 = vsel %vm239, %v237, 0
        %v247 = vsel %vm239, %v238, 0
        %249 = vmatprep.subr.mxu0 0.0
        %250 = vmatpush1.msra.mxu0 0.0
        %251 = vmatprep.subr.mxu0 0.0
        %252 = vmatpush1.msra.mxu0 0.0
        %253 = vmatprep.subr.mxu0 0.0
        %254 = vmatpush1.msra.mxu0 0.0
        %255 = vmatprep.subr.mxu0 0.0
        %256 = vmatpush1.msra.mxu0 0.0
        %257 = vmatprep.subr.mxu0 0.0
        %258 = vmatpush1.msra.mxu0 0.0
        %259 = vmatprep.subr.mxu0 0.0
        %260 = vmatpush1.msra.mxu0 0.0
        %261 = vmatprep.subr.mxu0 0.0
        %262 = vmatpush1.msra.mxu0 0.0
        %263 = vmatprep.subr.mxu0 0.0
        %264 = vmatpush1.msra.mxu0 0.0
        %265 = vmatprep.subr.mxu0 0.0
        %266 = vmatpush1.msra.mxu0 0.0
        %267 = vmatprep.subr.mxu0 0.0
        %268 = vmatpush1.msra.mxu0 0.0
        %269 = vmatprep.subr.mxu0 0.0
        %270 = vmatpush1.msra.mxu0 0.0
        %271 = vmatprep.subr.mxu0 0.0
        %272 = vmatpush1.msra.mxu0 0.0
        %273 = vmatprep.subr.mxu0 0.0
        %274 = vmatpush1.msra.mxu0 0.0
        %275 = vmatprep.subr.mxu0 0.0
        %276 = vmatpush1.msra.mxu0 %v235
        %277 = vmatprep.subr.mxu0 0.0
        %278 = vmatpush1.msra.mxu0 %v234
        %279 = vmatprep.subr.mxu0 0.0
        %280 = vmatpush1.msra.mxu0 %v233
        %281 = vmatprep.subr.mxu0 0.0
        %282 = vmatpush2.msra.mxu0 0.0
        %283 = vmatprep.subr.mxu0 0.0
        %284 = vmatpush2.msra.mxu0 0.0
        %285 = vmatprep.subr.mxu0 0.0
        %286 = vmatpush2.msra.mxu0 0.0
        %287 = vmatprep.subr.mxu0 0.0
        %288 = vmatpush2.msra.mxu0 0.0
        %289 = vmatprep.subr.mxu0 0.0
        %290 = vmatpush2.msra.mxu0 0.0
        %291 = vmatprep.subr.mxu0 0.0
        %292 = vmatpush2.msra.mxu0 0.0
        %293 = vmatprep.subr.mxu0 0.0
        %294 = vmatpush2.msra.mxu0 0.0
        %295 = vmatprep.subr.mxu0 0.0
        %296 = vmatpush2.msra.mxu0 0.0
        %297 = vmatprep.subr.mxu0 0.0
        %298 = vmatpush2.msra.mxu0 0.0
        %299 = vmatprep.subr.mxu0 0.0
        %300 = vmatpush2.msra.mxu0 0.0
        %301 = vmatprep.subr.mxu0 0.0
        %302 = vmatpush2.msra.mxu0 0.0
        %303 = vmatprep.subr.mxu0 0.0
        %304 = vmatpush2.msra.mxu0 0.0
        %305 = vmatprep.subr.mxu0 0.0
        %306 = vmatpush2.msra.mxu0 0.0
        %307 = vmatprep.subr.mxu0 0.0
        %308 = vmatpush2.msra.mxu0 0.0
        %309 = vmatprep.subr.mxu0 0.0
        %310 = vmatpush2.msra.mxu0 0.0
        %311 = vmatprep.subr.mxu0 0.0
        %312 = vmatpush2.msra.mxu0 0.0
        %313 = vmatprep.mubr.f32.mxu0 0.0
        %314 = vmatmul.mubr.f32.gmra.mxu0 %v241
        %v315 = vpop.f32.mrf.mxu0
        %v316 = vadd.f32 0.0, %v315
        %v317 = vpop.f32.mrf.mxu0
        %318 = vmatprep.mubr.f32.mxu0 0.0
        %319 = vmatmul.mubr.f32.gmra.mxu0 %v244
        %v320 = vpop.f32.mrf.mxu0
        %v321 = vadd.f32 0.0, %v320
        %v322 = vpop.f32.mrf.mxu0
        %323 = vmatprep.mubr.f32.mxu0 0.0
        %324 = vmatmul.mubr.f32.gmra.mxu0 %v247
        %v325 = vpop.f32.mrf.mxu0
        %v326 = vadd.f32 0.0, %v325
        %v327 = vpop.f32.mrf.mxu0
        %328 = vdwg.mxu0
        %v329 = vld [vmem:[#allocation5] sm:$0xff]
        %v330 = vld [vmem:[#allocation5 + $0x8] sm:$0xff]
        %v331 = vld [vmem:[#allocation5 + $0x10] sm:$0xff]
        %v332 = vmul.f32 %v233, %v316
        %v333 = vmul.f32 %v234, %v321
        %v334 = vmul.f32 %v235, %v326
        %v336 = vsel %vm239, %v329, 0
        %v339 = vsel %vm239, %v330, 0
        %v342 = vsel %vm239, %v331, 0
        %344 = vmatprep.subr.mxu0 0.0
        %345 = vmatpush1.msra.mxu0 0.0
        %346 = vmatprep.subr.mxu0 0.0
        %347 = vmatpush1.msra.mxu0 0.0
        %348 = vmatprep.subr.mxu0 0.0
        %349 = vmatpush1.msra.mxu0 0.0
        %350 = vmatprep.subr.mxu0 0.0
        %351 = vmatpush1.msra.mxu0 0.0
        %352 = vmatprep.subr.mxu0 0.0
        %353 = vmatpush1.msra.mxu0 0.0
        %354 = vmatprep.subr.mxu0 0.0
        %355 = vmatpush1.msra.mxu0 0.0
        %356 = vmatprep.subr.mxu0 0.0
        %357 = vmatpush1.msra.mxu0 0.0
        %358 = vmatprep.subr.mxu0 0.0
        %359 = vmatpush1.msra.mxu0 0.0
        %360 = vmatprep.subr.mxu0 0.0
        %361 = vmatpush1.msra.mxu0 0.0
        %362 = vmatprep.subr.mxu0 0.0
        %363 = vmatpush1.msra.mxu0 0.0
        %364 = vmatprep.subr.mxu0 0.0
        %365 = vmatpush1.msra.mxu0 0.0
        %366 = vmatprep.subr.mxu0 0.0
        %367 = vmatpush1.msra.mxu0 0.0
        %368 = vmatprep.subr.mxu0 0.0
        %369 = vmatpush1.msra.mxu0 0.0
        %370 = vmatprep.subr.mxu0 0.0
        %371 = vmatpush1.msra.mxu0 %v334
        %372 = vmatprep.subr.mxu0 0.0
        %373 = vmatpush1.msra.mxu0 %v333
        %374 = vmatprep.subr.mxu0 0.0
        %375 = vmatpush1.msra.mxu0 %v332
        %376 = vmatprep.subr.mxu0 0.0
        %377 = vmatpush2.msra.mxu0 0.0
        %378 = vmatprep.subr.mxu0 0.0
        %379 = vmatpush2.msra.mxu0 0.0
        %380 = vmatprep.subr.mxu0 0.0
        %381 = vmatpush2.msra.mxu0 0.0
        %382 = vmatprep.subr.mxu0 0.0
        %383 = vmatpush2.msra.mxu0 0.0
        %384 = vmatprep.subr.mxu0 0.0
        %385 = vmatpush2.msra.mxu0 0.0
        %386 = vmatprep.subr.mxu0 0.0
        %387 = vmatpush2.msra.mxu0 0.0
        %388 = vmatprep.subr.mxu0 0.0
        %389 = vmatpush2.msra.mxu0 0.0
        %390 = vmatprep.subr.mxu0 0.0
        %391 = vmatpush2.msra.mxu0 0.0
        %392 = vmatprep.subr.mxu0 0.0
        %393 = vmatpush2.msra.mxu0 0.0
        %394 = vmatprep.subr.mxu0 0.0
        %395 = vmatpush2.msra.mxu0 0.0
        %396 = vmatprep.subr.mxu0 0.0
        %397 = vmatpush2.msra.mxu0 0.0
        %398 = vmatprep.subr.mxu0 0.0
        %399 = vmatpush2.msra.mxu0 0.0
        %400 = vmatprep.subr.mxu0 0.0
        %401 = vmatpush2.msra.mxu0 0.0
        %402 = vmatprep.subr.mxu0 0.0
        %403 = vmatpush2.msra.mxu0 0.0
        %404 = vmatprep.subr.mxu0 0.0
        %405 = vmatpush2.msra.mxu0 0.0
        %406 = vmatprep.subr.mxu0 0.0
        %407 = vmatpush2.msra.mxu0 0.0
        %408 = vmatprep.mubr.f32.mxu0 0.0
        %409 = vmatmul.mubr.f32.gmra.mxu0 %v336
        %v410 = vpop.f32.mrf.mxu0
        %v411 = vadd.f32 0.0, %v410
        %v412 = vpop.f32.mrf.mxu0
        %413 = vmatprep.mubr.f32.mxu0 0.0
        %414 = vmatmul.mubr.f32.gmra.mxu0 %v339
        %v415 = vpop.f32.mrf.mxu0
        %v416 = vadd.f32 0.0, %v415
        %v417 = vpop.f32.mrf.mxu0
        %418 = vmatprep.mubr.f32.mxu0 0.0
        %419 = vmatmul.mubr.f32.gmra.mxu0 %v342
        %v420 = vpop.f32.mrf.mxu0
        %v421 = vadd.f32 0.0, %v420
        %v422 = vpop.f32.mrf.mxu0
        %423 = vdwg.mxu0
        %v424 = vmul.f32 %v316, %v316
        %v425 = vmul.f32 %v321, %v321
        %v426 = vmul.f32 %v326, %v326
        %427 = vmatprep.subr.mxu0 0.0
        %428 = vmatpush1.msra.mxu0 0.0
        %429 = vmatprep.subr.mxu0 0.0
        %430 = vmatpush1.msra.mxu0 0.0
        %431 = vmatprep.subr.mxu0 0.0
        %432 = vmatpush1.msra.mxu0 0.0
        %433 = vmatprep.subr.mxu0 0.0
        %434 = vmatpush1.msra.mxu0 0.0
        %435 = vmatprep.subr.mxu0 0.0
        %436 = vmatpush1.msra.mxu0 0.0
        %437 = vmatprep.subr.mxu0 0.0
        %438 = vmatpush1.msra.mxu0 0.0
        %439 = vmatprep.subr.mxu0 0.0
        %440 = vmatpush1.msra.mxu0 0.0
        %441 = vmatprep.subr.mxu0 0.0
        %442 = vmatpush1.msra.mxu0 0.0
        %443 = vmatprep.subr.mxu0 0.0
        %444 = vmatpush1.msra.mxu0 0.0
        %445 = vmatprep.subr.mxu0 0.0
        %446 = vmatpush1.msra.mxu0 0.0
        %447 = vmatprep.subr.mxu0 0.0
        %448 = vmatpush1.msra.mxu0 0.0
        %449 = vmatprep.subr.mxu0 0.0
        %450 = vmatpush1.msra.mxu0 0.0
        %451 = vmatprep.subr.mxu0 0.0
        %452 = vmatpush1.msra.mxu0 0.0
        %453 = vmatprep.subr.mxu0 0.0
        %454 = vmatpush1.msra.mxu0 %v426
        %455 = vmatprep.subr.mxu0 0.0
        %456 = vmatpush1.msra.mxu0 %v425
        %457 = vmatprep.subr.mxu0 0.0
        %458 = vmatpush1.msra.mxu0 %v424
        %459 = vmatprep.subr.mxu0 0.0
        %460 = vmatpush2.msra.mxu0 0.0
        %461 = vmatprep.subr.mxu0 0.0
        %462 = vmatpush2.msra.mxu0 0.0
        %463 = vmatprep.subr.mxu0 0.0
        %464 = vmatpush2.msra.mxu0 0.0
        %465 = vmatprep.subr.mxu0 0.0
        %466 = vmatpush2.msra.mxu0 0.0
        %467 = vmatprep.subr.mxu0 0.0
        %468 = vmatpush2.msra.mxu0 0.0
        %469 = vmatprep.subr.mxu0 0.0
        %470 = vmatpush2.msra.mxu0 0.0
        %471 = vmatprep.subr.mxu0 0.0
        %472 = vmatpush2.msra.mxu0 0.0
        %473 = vmatprep.subr.mxu0 0.0
        %474 = vmatpush2.msra.mxu0 0.0
        %475 = vmatprep.subr.mxu0 0.0
        %476 = vmatpush2.msra.mxu0 0.0
        %477 = vmatprep.subr.mxu0 0.0
        %478 = vmatpush2.msra.mxu0 0.0
        %479 = vmatprep.subr.mxu0 0.0
        %480 = vmatpush2.msra.mxu0 0.0
        %481 = vmatprep.subr.mxu0 0.0
        %482 = vmatpush2.msra.mxu0 0.0
        %483 = vmatprep.subr.mxu0 0.0
        %484 = vmatpush2.msra.mxu0 0.0
        %485 = vmatprep.subr.mxu0 0.0
        %486 = vmatpush2.msra.mxu0 0.0
        %487 = vmatprep.subr.mxu0 0.0
        %488 = vmatpush2.msra.mxu0 0.0
        %489 = vmatprep.subr.mxu0 0.0
        %490 = vmatpush2.msra.mxu0 0.0
        %491 = vmatprep.mubr.f32.mxu0 0.0
        %492 = vmatmul.mubr.f32.gmra.mxu0 %v336
        %v493 = vpop.f32.mrf.mxu0
        %v494 = vadd.f32 1e-06, %v493
        %v495 = vpop.f32.mrf.mxu0
        %496 = vmatprep.mubr.f32.mxu0 0.0
        %497 = vmatmul.mubr.f32.gmra.mxu0 %v339
        %v498 = vpop.f32.mrf.mxu0
        %v499 = vadd.f32 1e-06, %v498
        %v500 = vpop.f32.mrf.mxu0
        %501 = vmatprep.mubr.f32.mxu0 0.0
        %502 = vmatmul.mubr.f32.gmra.mxu0 %v342
        %v503 = vpop.f32.mrf.mxu0
        %v504 = vadd.f32 1e-06, %v503
        %v505 = vpop.f32.mrf.mxu0
        %506 = vdwg.mxu0
        %v507 = vrcp.pop %v494
        %v508 = vrcp.pop %v499
        %v509 = vrcp.pop %v504
        %vm510 = vcmp.lt.f32.partialorder %v411, 0.0
        %vm511 = vcmp.lt.f32.partialorder %v416, 0.0
        %vm512 = vcmp.lt.f32.partialorder %v421, 0.0
        %v513 = vmul.f32 %v411, %v507
        %v514 = vmul.f32 %v416, %v508
        %v515 = vmul.f32 %v421, %v509
        %v516 = vmul.f32 %v513, 0.8
        %v517 = vmul.f32 %v514, 0.8
        %v518 = vmul.f32 %v515, 0.8
        %v519 = vsel %vm510, %v516, 0.0
        %v520 = vsel %vm511, %v517, 0.0
        %v521 = vsel %vm512, %v518, 0.0
        %v522 = vmul.f32 %v519, %v316
        %v523 = vmul.f32 %v520, %v321
        %v524 = vmul.f32 %v521, %v326
        %v525 = vsub.f32 %v233, %v522
        %v526 = vsub.f32 %v234, %v523
        %v527 = vsub.f32 %v235, %v524
        %528 = vst [vmem:[%s232] sm:$0xff] %v525
        %529 = vst [vmem:[%s232 + $0x8] sm:$0xff] %v526
        %530 = vst [vmem:[%s232 + $0x10] sm:$0xff] %v527
        %s531 = sand.u32 %s111, 1
        %s532 = scalar_lea.sflag [#allocation4], %s531
        %s533 = sand.u32 %s111, 1
        %s534 = smul.addr %s533, 24
        %s535 = scalar_lea.vmem [#allocation8], %s534
        // Predicated region
        $region45: #{tpu_custom_call.1} parent=31 // pred_check
          %p536 = pneg %p121
        $region46: #{tpu_custom_call.1} parent=31 // pred_check_branch
          %538 = sbr.rel (%p536) target = $region48
        $region47: #{tpu_custom_call.1} parent=31 // pred_region
          %s540 = ssub.s32 384, 384
          %541 = vsyncadd %s532, %s540
          %s542 = smul.addr %s23, 12
          %s543 = sadd.s32 %s24, %s542
          %s544 = smul.addr %s543, 128
          %s545 = scalar_lea.hbm %s3, %s544
          %s546 = sshll.u32 %s535, 4
          %s547 = int_to_ptr.vmem [resolvable:$true] %s546
          %552 = dma.vmem_to_hbm [thread:$0]  %s547, 384, %s545, %s532, 128, 512, 8
        $region48: #{tpu_custom_call.1} parent=31 // pred_fallthru
          _
      $region32: #{tpu_custom_call.1} parent=5 // pred_fallthru
        _
      %p553 = scmp.le.s32.totalorder 2, %s14
      // Predicated region
      $region49: #{tpu_custom_call.1} parent=5 // pred_check
        %p554 = pneg %p553
      $region50: #{tpu_custom_call.1} parent=5 // pred_check_branch
        %556 = sbr.rel (%p554) target = $region52
      $region51: #{tpu_custom_call.1} parent=5 // pred_region
        %s557 = ssub.s32 %s14, 2
        // Predicated region
        $region53: #{tpu_custom_call.1} parent=51 // pred_check
          %p558 = pneg %p127
        $region54: #{tpu_custom_call.1} parent=51 // pred_check_branch
          %560 = sbr.rel (%p558) target = $region56
        $region55: #{tpu_custom_call.1} parent=51 // pred_region
          %s561 = sand.u32 %s112, 1
          %s562 = scalar_lea.sflag [#allocation4], %s561
          %s563 = sand.u32 %s112, 1
          %s564 = smul.addr %s563, 24
          %s565 = scalar_lea.vmem [#allocation8], %s564
          %566 = dma.done %s562, 384
        $region56: #{tpu_custom_call.1} parent=51 // pred_fallthru
          _
      $region52: #{tpu_custom_call.1} parent=5 // pred_fallthru
        _
    $region6: #{tpu_custom_call.1} parent=1 // loop_footer
      %s18 = sadd.s32 1, %s14
    $region7: #{tpu_custom_call.1} parent=1 // loop_footer_branch
      %13 = sbr.rel target = $region3
    $region8: #{tpu_custom_call.1} parent=1 // loop_exit
      _
    %567 = vsyncpa [#allocation3], 1
    %s568 = scalar_lea.sflag [#allocation3], 1
    %569 = vsyncpa %s568, 1
    %570 = vsyncpa [#allocation6], 1
    %571 = vsyncpa [#allocation4], 1
    %s572 = scalar_lea.sflag [#allocation4], 1
    %573 = vsyncpa %s572, 1

</llo_original>
